<compile_context>
chip_gen: v7x
topology: tpu7x:2x2x1
jax: 0.10.0
libtpu: 0.0.40
codegen_flags: <defaults>
</compile_context>

<pallas_src>
import functools

import jax
import jax.numpy as jnp
from jax.experimental import pallas as pl
from jax.experimental.pallas import tpu as pltpu

LN_EPS = 1e-5
_LANE = 128
_SUBLANE = 8
_MAX_ROW_TILE = 2048
_VMEM_BUDGET = 24 * 1024 * 1024  # conservative cap, fits v7x's 64 MiB part
_VMEM_LIMIT = 32 * 1024 * 1024   # explicit scoped-VMEM limit (v5e/v6e/v7x safe)


def _round_up(x, m):
    return ((x + m - 1) // m) * m


def _utt_enc_kernel(x_ref, gamma_ref, beta_ref, w_ref, bias_ref, o_ref, *, inv_n):
    # x_ref: (row_tile, in_dim) tile of rows.
    x = x_ref[...].astype(jnp.float32)

    # LayerNorm over last dim (biased variance, matching torch.nn.LayerNorm).
    # E[x^2] - mean^2 form: two independent cross-lane (XLU) reductions.
    s1 = jnp.sum(x, axis=-1, keepdims=True)
    s2 = jnp.sum(x * x, axis=-1, keepdims=True)
    mean = s1 * inv_n
    var = s2 * inv_n - mean * mean
    rstd = jax.lax.rsqrt(var + LN_EPS)          # EUP slot

    # Fold affine: y = x * (rstd*gamma) + (beta - mean*rstd*gamma)
    scale = rstd * gamma_ref[...]
    shift = beta_ref[...] - mean * scale
    y = x * scale + shift

    # ReLU
    y = jnp.maximum(y, 0.0)

    # Linear: y @ W^T + b.  w_ref is the torch (out_pad, in_dim) layout,
    # consumed directly by contracting in_dim against in_dim (no transpose).
    out = jax.lax.dot_general(
        y, w_ref[...],
        dimension_numbers=(((1,), (1,)), ((), ())),
        preferred_element_type=jnp.float32,
    )
    out = out + bias_ref[...]

    o_ref[...] = out.astype(o_ref.dtype)


def _pick_row_tile(m, in_dim, out_pad, requested):
    if requested is not None:
        tile = _round_up(requested, _SUBLANE)
    else:
        # Aim for big tiles, but keep >= 2 grid steps (megacore on v7x)
        # when the problem allows it; cap at _MAX_ROW_TILE rows.
        half = _round_up(pl.cdiv(m, 2), _SUBLANE)
        tile = max(_SUBLANE, min(_MAX_ROW_TILE, half))

    # Keep double-buffered tiles + resident params under the VMEM budget.
    def vmem_bytes(t):
        x_b = 2 * t * in_dim * 4
        o_b = 2 * t * out_pad * 4
        const_b = 2 * (2 * in_dim + out_pad + out_pad * in_dim) * 4
        return x_b + o_b + const_b

    while tile > _SUBLANE and vmem_bytes(tile) > _VMEM_BUDGET:
        tile = _round_up(tile // 2, _SUBLANE)
    return tile


def utterance_encoder(x, gamma, beta, weight, bias, *, row_tile=None):
    """x: (batch, seq, in_dim)  -> (batch, seq, out_dim)

    gamma, beta : (in_dim,)         LayerNorm affine params
    weight      : (out_dim, in_dim) torch Linear weight
    bias        : (out_dim,)        torch Linear bias
    """
    batch, seq, in_dim = x.shape
    out_dim = weight.shape[0]
    m = batch * seq

    # Lane-dense output: pad out_dim to a multiple of 128 with zero rows of W
    # (and zero bias).  Sliced back off in the wrapper.
    out_pad = _round_up(out_dim, _LANE)

    row_tile = _pick_row_tile(m, in_dim, out_pad, row_tile)
    m_pad = _round_up(m, row_tile)

    x2d = x.reshape(m, in_dim)
    if m_pad != m:
        x2d = jnp.pad(x2d, ((0, m_pad - m), (0, 0)))

    gamma2d = gamma.reshape(1, in_dim).astype(jnp.float32)
    beta2d = beta.reshape(1, in_dim).astype(jnp.float32)
    w_p = weight if out_pad == out_dim else jnp.pad(
        weight, ((0, out_pad - out_dim), (0, 0)))          # (out_pad, in_dim)
    bias2d = bias.reshape(1, out_dim).astype(jnp.float32)
    if out_pad != out_dim:
        bias2d = jnp.pad(bias2d, ((0, 0), (0, out_pad - out_dim)))

    grid = (m_pad // row_tile,)

    kernel = functools.partial(_utt_enc_kernel, inv_n=1.0 / float(in_dim))

    out2d = pl.pallas_call(
        kernel,
        out_shape=jax.ShapeDtypeStruct((m_pad, out_pad), x.dtype),
        grid_spec=pltpu.PrefetchScalarGridSpec(
            num_scalar_prefetch=0,
            grid=grid,
            in_specs=[
                pl.BlockSpec((row_tile, in_dim), lambda i: (i, 0)),   # x rows
                pl.BlockSpec((1, in_dim), lambda i: (0, 0)),          # gamma (resident)
                pl.BlockSpec((1, in_dim), lambda i: (0, 0)),          # beta  (resident)
                pl.BlockSpec((out_pad, in_dim), lambda i: (0, 0)),    # W     (resident)
                pl.BlockSpec((1, out_pad), lambda i: (0, 0)),         # bias  (resident)
            ],
            out_specs=pl.BlockSpec((row_tile, out_pad), lambda i: (i, 0)),
        ),
        compiler_params=pltpu.CompilerParams(
            dimension_semantics=("parallel",),
            vmem_limit_bytes=_VMEM_LIMIT,
        ),
    )(x2d, gamma2d, beta2d, w_p, bias2d)

    return out2d[:m, :out_dim].reshape(batch, seq, out_dim)


def _reference(x, gamma, beta, weight, bias):
    """Pure-JAX reference mirroring the torch forward pass."""
    xf = x.astype(jnp.float32)
    mean = jnp.mean(xf, axis=-1, keepdims=True)
    var = jnp.mean((xf - mean) ** 2, axis=-1, keepdims=True)
    xn = (xf - mean) / jnp.sqrt(var + LN_EPS)
    y = xn * gamma + beta
    y = jnp.maximum(y, 0.0)
    return y @ weight.T + bias


if __name__ == "__main__":
    key = jax.random.PRNGKey(0)
    k_utt, k_g, k_b, k_w, k_bias = jax.random.split(key, 5)

    batch, seq, in_dim, out_dim = 2, 8, 32, 32

    # The torch module receives a list of `seq` tensors of shape (batch, in_dim)
    # which it stacks and transposes to (batch, seq, in_dim).  We build the
    # stacked tensor directly.
    utt_list = jax.random.normal(k_utt, (seq, batch, in_dim), dtype=jnp.float32)
    x = jnp.transpose(utt_list, (1, 0, 2))  # stack(...).transpose(0,1)

    # Deterministic synthetic parameters (shapes from the module __init__).
    gamma = 1.0 + 0.1 * jax.random.normal(k_g, (in_dim,), dtype=jnp.float32)
    beta = 0.1 * jax.random.normal(k_b, (in_dim,), dtype=jnp.float32)
    weight = 0.1 * jax.random.normal(k_w, (out_dim, in_dim), dtype=jnp.float32)
    bias = 0.1 * jax.random.normal(k_bias, (out_dim,), dtype=jnp.float32)

    out = utterance_encoder(x, gamma, beta, weight, bias)
    out = jax.block_until_ready(out)

    ref = _reference(x, gamma, beta, weight, bias)
    assert out.shape == (batch, seq, out_dim)
    assert jnp.allclose(out, ref, atol=1e-4, rtol=1e-4), "mismatch vs reference"

    # Also exercise a non-divisible, larger row count to check padding path.
    x_big = jax.random.normal(key, (3, 37, in_dim), dtype=jnp.float32)
    out_big = jax.block_until_ready(
        utterance_encoder(x_big, gamma, beta, weight, bias))
    ref_big = _reference(x_big, gamma, beta, weight, bias)
    assert out_big.shape == (3, 37, out_dim)
    assert jnp.allclose(out_big, ref_big, atol=1e-4, rtol=1e-4), "mismatch (padded path)"

    print("KERNEL_OK")
</pallas_src>

<mosaic_0001>
module attributes {stable_mosaic.version = 11 : i64} {
  func.func @_utt_enc_kernel(%arg0: i32, %arg1: memref<8x32xf32, #tpu.memory_space<vmem>>, %arg2: memref<1x32xf32, #tpu.memory_space<vmem>>, %arg3: memref<1x32xf32, #tpu.memory_space<vmem>>, %arg4: memref<128x32xf32, #tpu.memory_space<vmem>>, %arg5: memref<1x128xf32, #tpu.memory_space<vmem>>, %arg6: memref<8x128xf32, #tpu.memory_space<vmem>>) attributes {dimension_semantics = [#tpu.dimension_semantics<parallel>], iteration_bounds = array<i64: 2>, scalar_prefetch = 0 : i64, scratch_operands = 0 : i64, tpu.core_type = #tpu.core_type<tc>, window_params = [{transform_indices = @transform_0, window_bounds = array<i64: 8, 32>}, {pipeline_mode = #tpu.pipeline_mode<synchronous>, transform_indices = @transform_1, window_bounds = array<i64: 1, 32>}, {pipeline_mode = #tpu.pipeline_mode<synchronous>, transform_indices = @transform_2, window_bounds = array<i64: 1, 32>}, {pipeline_mode = #tpu.pipeline_mode<synchronous>, transform_indices = @transform_3, window_bounds = array<i64: 128, 32>}, {pipeline_mode = #tpu.pipeline_mode<synchronous>, transform_indices = @transform_4, window_bounds = array<i64: 1, 128>}, {transform_indices = @transform_5, window_bounds = array<i64: 8, 128>}]} {
    %c0 = arith.constant 0 : index
    %c0_0 = arith.constant 0 : index
    %0 = vector.load %arg1[%c0, %c0_0] : memref<8x32xf32, #tpu.memory_space<vmem>>, vector<8x32xf32>
    %cst = arith.constant dense<0.000000e+00> : vector<8xf32>
    %1 = vector.multi_reduction <add>, %0, %cst [1] : vector<8x32xf32> to vector<8xf32>
    %2 = vector.shape_cast %1 : vector<8xf32> to vector<8x1xf32>
    %3 = arith.mulf %0, %0 : vector<8x32xf32>
    %cst_1 = arith.constant dense<0.000000e+00> : vector<8xf32>
    %4 = vector.multi_reduction <add>, %3, %cst_1 [1] : vector<8x32xf32> to vector<8xf32>
    %5 = vector.shape_cast %4 : vector<8xf32> to vector<8x1xf32>
    %cst_2 = arith.constant 3.125000e-02 : f32
    %6 = vector.broadcast %cst_2 : f32 to vector<8x1xf32>
    %7 = arith.mulf %2, %6 : vector<8x1xf32>
    %cst_3 = arith.constant 3.125000e-02 : f32
    %8 = vector.broadcast %cst_3 : f32 to vector<8x1xf32>
    %9 = arith.mulf %5, %8 : vector<8x1xf32>
    %10 = arith.mulf %7, %7 : vector<8x1xf32>
    %11 = arith.subf %9, %10 : vector<8x1xf32>
    %cst_4 = arith.constant 9.99999974E-6 : f32
    %12 = vector.broadcast %cst_4 : f32 to vector<8x1xf32>
    %13 = arith.addf %11, %12 : vector<8x1xf32>
    %14 = math.rsqrt %13 : vector<8x1xf32>
    %c0_5 = arith.constant 0 : index
    %c0_6 = arith.constant 0 : index
    %15 = vector.load %arg2[%c0_5, %c0_6] : memref<1x32xf32, #tpu.memory_space<vmem>>, vector<1x32xf32>
    %16 = vector.broadcast %14 : vector<8x1xf32> to vector<8x32xf32>
    %17 = vector.broadcast %15 : vector<1x32xf32> to vector<8x32xf32>
    %18 = arith.mulf %16, %17 : vector<8x32xf32>
    %c0_7 = arith.constant 0 : index
    %c0_8 = arith.constant 0 : index
    %19 = vector.load %arg3[%c0_7, %c0_8] : memref<1x32xf32, #tpu.memory_space<vmem>>, vector<1x32xf32>
    %20 = vector.broadcast %7 : vector<8x1xf32> to vector<8x32xf32>
    %21 = arith.mulf %20, %18 : vector<8x32xf32>
    %22 = vector.broadcast %19 : vector<1x32xf32> to vector<8x32xf32>
    %23 = arith.subf %22, %21 : vector<8x32xf32>
    %24 = arith.mulf %0, %18 : vector<8x32xf32>
    %25 = arith.addf %24, %23 : vector<8x32xf32>
    %cst_9 = arith.constant 0.000000e+00 : f32
    %26 = vector.broadcast %cst_9 : f32 to vector<8x32xf32>
    %27 = arith.maximumf %25, %26 : vector<8x32xf32>
    %c0_10 = arith.constant 0 : index
    %c0_11 = arith.constant 0 : index
    %28 = vector.load %arg4[%c0_10, %c0_11] : memref<128x32xf32, #tpu.memory_space<vmem>>, vector<128x32xf32>
    %cst_12 = arith.constant dense<0.000000e+00> : vector<8x128xf32>
    %29 = tpu.matmul %27, %28, %cst_12 {dimension_numbers = #tpu.dot_dimension_numbers<[1], [1], [0], [0], [0, 0, 1, 0], [], []>} : vector<8x32xf32>, vector<128x32xf32>, vector<8x128xf32> -> vector<8x128xf32>
    %c0_13 = arith.constant 0 : index
    %c0_14 = arith.constant 0 : index
    %30 = vector.load %arg5[%c0_13, %c0_14] : memref<1x128xf32, #tpu.memory_space<vmem>>, vector<1x128xf32>
    %31 = vector.broadcast %30 : vector<1x128xf32> to vector<8x128xf32>
    %32 = arith.addf %29, %31 : vector<8x128xf32>
    %c0_15 = arith.constant 0 : index
    %c0_16 = arith.constant 0 : index
    %33 = vector.load %arg6[%c0_15, %c0_16] : memref<8x128xf32, #tpu.memory_space<vmem>>, vector<8x128xf32>
    tpu.vector_store %arg6[%c0_15, %c0_16], %32 {strides = array<i32>} : memref<8x128xf32, #tpu.memory_space<vmem>>, vector<8x128xf32>,
    return
  }
  func.func @transform_0(%arg0: i32) -> (i32, i32) {
    %c0_i32 = arith.constant 0 : i32
    %c0_i32_0 = arith.constant 0 : i32
    return %arg0, %c0_i32 : i32, i32
  }
  func.func @transform_1(%arg0: i32) -> (i32, i32) {
    %c0_i32 = arith.constant 0 : i32
    %c0_i32_0 = arith.constant 0 : i32
    %c0_i32_1 = arith.constant 0 : i32
    return %c0_i32, %c0_i32_0 : i32, i32
  }
  func.func @transform_2(%arg0: i32) -> (i32, i32) {
    %c0_i32 = arith.constant 0 : i32
    %c0_i32_0 = arith.constant 0 : i32
    %c0_i32_1 = arith.constant 0 : i32
    return %c0_i32, %c0_i32_0 : i32, i32
  }
  func.func @transform_3(%arg0: i32) -> (i32, i32) {
    %c0_i32 = arith.constant 0 : i32
    %c0_i32_0 = arith.constant 0 : i32
    %c0_i32_1 = arith.constant 0 : i32
    return %c0_i32, %c0_i32_0 : i32, i32
  }
  func.func @transform_4(%arg0: i32) -> (i32, i32) {
    %c0_i32 = arith.constant 0 : i32
    %c0_i32_0 = arith.constant 0 : i32
    %c0_i32_1 = arith.constant 0 : i32
    return %c0_i32, %c0_i32_0 : i32, i32
  }
  func.func @transform_5(%arg0: i32) -> (i32, i32) {
    %c0_i32 = arith.constant 0 : i32
    %c0_i32_0 = arith.constant 0 : i32
    return %arg0, %c0_i32 : i32, i32
  }
}

</mosaic_0001>

<llo_original>
// kernel: tpu_custom_call.1
$region0: #{tpu_custom_call.1}
  #allocation0 [shape = 'u32[]', space=smem, size = 0x4, offset = 0x4, fixed_abs, tag = 'smem constant byte address 0x4 - core index']
  #allocation1 [shape = 'u32[144,128]{1,0:T(1,128)}', space=vmem, size = 0x12000, scoped, tag = 'internal scratch']
  %s0 = inlined_call_operand.vmem [shape: f32[16,32], index: 0, kind: input, shape index: {}]
  %s1 = inlined_call_operand.vmem [shape: f32[1,32], index: 1, kind: input, shape index: {}]
  %s2 = inlined_call_operand.vmem [shape: f32[1,32], index: 2, kind: input, shape index: {}]
  %s3 = inlined_call_operand.vmem [shape: f32[128,32], index: 3, kind: input, shape index: {}]
  %s4 = inlined_call_operand.vmem [shape: f32[1,128], index: 4, kind: input, shape index: {}]
  %s5 = inlined_call_operand.hbm [shape: f32[16,128], index: 5, kind: output, shape index: {}]
  %s6 = sld [smem:[#allocation0]]
  $region53: #{tpu_custom_call.1} parent=0
    _
  %s8 = ssub.s32 1, %s6
  %s9 = scalar_select 0, %s8, %s6
  $region1: #{tpu_custom_call.1} parent=0
    #allocation2 [shape = 'u8[8192]{0}', space=vmem, size = 0x2000, scoped, tag = 'output window, operand 0']
    #allocation3 [shape = 's32[2]{0}', space=sflag, size = 0x8, scoped, tag = 'scoped memory for tpu_custom_call.1']
    %10 = vsyncpa [#allocation3], 0
    %s11 = scalar_lea.sflag [#allocation3], 1
    %12 = vsyncpa %s11, 0
    loop: start=0, step=1, limit=4
    $region2: #{tpu_custom_call.1} parent=1 // loop_pre_header
      _
    $region3: #{tpu_custom_call.1} parent=1 // loop_header
      %s14 = sphi 0, %s18
      %p15 = scmp.ge.s32.totalorder %s14, 4
      %s24 = sphi 0, %s26
      %s27 = sphi 0, %s24
      %s28 = sphi 0, %s27
      %s44 = sphi 0, %s28
      %s48 = sphi 0, %s48
      %s50 = sphi 0, %s48
      %s51 = sphi 0, %s50
      %s65 = sphi 0, %s51
      %s69 = sphi 0, %s69
      %s71 = sphi 0, %s69
      %s72 = sphi 0, %s71
      %s86 = sphi 0, %s72
      %s90 = sphi 0, %s90
      %s92 = sphi 0, %s90
      %s93 = sphi 0, %s92
      %s107 = sphi 0, %s93
      %s111 = sphi 0, %s111
      %s113 = sphi 0, %s111
      %s114 = sphi 0, %s113
      %s128 = sphi 0, %s114
      %s134 = sphi 0, %s136
      %s137 = sphi 0, %s134
      %s138 = sphi 0, %s137
      %s154 = sphi 0, %s138
    $region4: #{tpu_custom_call.1} parent=1 // loop_header_branch
      %17 = sbr.rel (%p15) target = $region8
    $region5: #{tpu_custom_call.1} parent=1 // loop_body
      %s19 = ssub.s32 %s14, 1
      %s20 = ssub.s32 %s14, 2
      %s21 = sadd.s32 %s14, 1
      %s22 = ssub.s32 %s14, %s21
      %p23 = scmp.eq.s32.totalorder %s22, 0
      %s25 = sadd.s32 %s24, 1
      %s26 = scalar_select %p23, %s24, %s25
      %p29 = pneg %p23
      %p30 = scmp.eq.s32.totalorder %s14, 1
      %p31 = por %p29, %p30
      %p32 = scmp.ne.s32.totalorder %s24, %s27
      %p33 = scmp.eq.s32.totalorder %s14, 0
      %p34 = por %p32, %p33
      %p35 = scmp.ne.s32.totalorder %s24, %s27
      %p36 = scmp.eq.s32.totalorder %s19, 1
      %p37 = por %p35, %p36
      %p38 = scmp.ne.s32.totalorder %s27, %s28
      %p39 = scmp.eq.s32.totalorder %s19, 0
      %p40 = por %p38, %p39
      %p41 = scmp.ne.s32.totalorder %s27, %s28
      %p42 = scmp.eq.s32.totalorder %s20, 1
      %p43 = por %p41, %p42
      %p45 = scmp.ne.s32.totalorder %s28, %s44
      %p46 = scmp.eq.s32.totalorder %s20, 0
      %p47 = por %p45, %p46
      %s49 = sadd.s32 %s48, 1
      %p52 = scmp.eq.s32.totalorder %s14, 1
      %p53 = scmp.ne.s32.totalorder %s48, %s50
      %p54 = scmp.eq.s32.totalorder %s14, 0
      %p55 = por %p53, %p54
      %p56 = scmp.ne.s32.totalorder %s48, %s50
      %p57 = scmp.eq.s32.totalorder %s19, 1
      %p58 = por %p56, %p57
      %p59 = scmp.ne.s32.totalorder %s50, %s51
      %p60 = scmp.eq.s32.totalorder %s19, 0
      %p61 = por %p59, %p60
      %p62 = scmp.ne.s32.totalorder %s50, %s51
      %p63 = scmp.eq.s32.totalorder %s20, 1
      %p64 = por %p62, %p63
      %p66 = scmp.ne.s32.totalorder %s51, %s65
      %p67 = scmp.eq.s32.totalorder %s20, 0
      %p68 = por %p66, %p67
      %s70 = sadd.s32 %s69, 1
      %p73 = scmp.eq.s32.totalorder %s14, 1
      %p74 = scmp.ne.s32.totalorder %s69, %s71
      %p75 = scmp.eq.s32.totalorder %s14, 0
      %p76 = por %p74, %p75
      %p77 = scmp.ne.s32.totalorder %s69, %s71
      %p78 = scmp.eq.s32.totalorder %s19, 1
      %p79 = por %p77, %p78
      %p80 = scmp.ne.s32.totalorder %s71, %s72
      %p81 = scmp.eq.s32.totalorder %s19, 0
      %p82 = por %p80, %p81
      %p83 = scmp.ne.s32.totalorder %s71, %s72
      %p84 = scmp.eq.s32.totalorder %s20, 1
      %p85 = por %p83, %p84
      %p87 = scmp.ne.s32.totalorder %s72, %s86
      %p88 = scmp.eq.s32.totalorder %s20, 0
      %p89 = por %p87, %p88
      %s91 = sadd.s32 %s90, 1
      %p94 = scmp.eq.s32.totalorder %s14, 1
      %p95 = scmp.ne.s32.totalorder %s90, %s92
      %p96 = scmp.eq.s32.totalorder %s14, 0
      %p97 = por %p95, %p96
      %p98 = scmp.ne.s32.totalorder %s90, %s92
      %p99 = scmp.eq.s32.totalorder %s19, 1
      %p100 = por %p98, %p99
      %p101 = scmp.ne.s32.totalorder %s92, %s93
      %p102 = scmp.eq.s32.totalorder %s19, 0
      %p103 = por %p101, %p102
      %p104 = scmp.ne.s32.totalorder %s92, %s93
      %p105 = scmp.eq.s32.totalorder %s20, 1
      %p106 = por %p104, %p105
      %p108 = scmp.ne.s32.totalorder %s93, %s107
      %p109 = scmp.eq.s32.totalorder %s20, 0
      %p110 = por %p108, %p109
      %s112 = sadd.s32 %s111, 1
      %p115 = scmp.eq.s32.totalorder %s14, 1
      %p116 = scmp.ne.s32.totalorder %s111, %s113
      %p117 = scmp.eq.s32.totalorder %s14, 0
      %p118 = por %p116, %p117
      %p119 = scmp.ne.s32.totalorder %s111, %s113
      %p120 = scmp.eq.s32.totalorder %s19, 1
      %p121 = por %p119, %p120
      %p122 = scmp.ne.s32.totalorder %s113, %s114
      %p123 = scmp.eq.s32.totalorder %s19, 0
      %p124 = por %p122, %p123
      %p125 = scmp.ne.s32.totalorder %s113, %s114
      %p126 = scmp.eq.s32.totalorder %s20, 1
      %p127 = por %p125, %p126
      %p129 = scmp.ne.s32.totalorder %s114, %s128
      %p130 = scmp.eq.s32.totalorder %s20, 0
      %p131 = por %p129, %p130
      %s132 = ssub.s32 %s14, %s21
      %p133 = scmp.eq.s32.totalorder %s132, 0
      %s135 = sadd.s32 %s134, 1
      %s136 = scalar_select %p133, %s134, %s135
      %p139 = pneg %p133
      %p140 = scmp.eq.s32.totalorder %s14, 1
      %p141 = por %p139, %p140
      %p142 = scmp.ne.s32.totalorder %s134, %s137
      %p143 = scmp.eq.s32.totalorder %s14, 0
      %p144 = por %p142, %p143
      %p145 = scmp.ne.s32.totalorder %s134, %s137
      %p146 = scmp.eq.s32.totalorder %s19, 1
      %p147 = por %p145, %p146
      %p148 = scmp.ne.s32.totalorder %s137, %s138
      %p149 = scmp.eq.s32.totalorder %s19, 0
      %p150 = por %p148, %p149
      %p151 = scmp.ne.s32.totalorder %s137, %s138
      %p152 = scmp.eq.s32.totalorder %s20, 1
      %p153 = por %p151, %p152
      %p155 = scmp.ne.s32.totalorder %s138, %s154
      %p156 = scmp.eq.s32.totalorder %s20, 0
      %p157 = por %p155, %p156
      %p158 = scmp.le.s32.totalorder 1, %s14
      %p159 = scmp.lt.s32.totalorder %s14, 3
      %p160 = pnand %p158, %p159
      %p161 = pneg %p160
      // Predicated region
      $region9: #{tpu_custom_call.1} parent=5 // pred_check
        _
      $region10: #{tpu_custom_call.1} parent=5 // pred_check_branch
        %163 = sbr.rel (%p160) target = $region12
      $region11: #{tpu_custom_call.1} parent=5 // pred_region
        %s164 = ssub.s32 %s14, 1
        // Predicated region
        $region13: #{tpu_custom_call.1} parent=11 // pred_check
          %p165 = pneg %p61
        $region14: #{tpu_custom_call.1} parent=11 // pred_check_branch
          %167 = sbr.rel (%p165) target = $region16
        $region15: #{tpu_custom_call.1} parent=11 // pred_region
          _
        $region16: #{tpu_custom_call.1} parent=11 // pred_fallthru
          _
        // Predicated region
        $region17: #{tpu_custom_call.1} parent=11 // pred_check
          %p168 = pneg %p82
        $region18: #{tpu_custom_call.1} parent=11 // pred_check_branch
          %170 = sbr.rel (%p168) target = $region20
        $region19: #{tpu_custom_call.1} parent=11 // pred_region
          _
        $region20: #{tpu_custom_call.1} parent=11 // pred_fallthru
          _
        // Predicated region
        $region21: #{tpu_custom_call.1} parent=11 // pred_check
          %p171 = pneg %p103
        $region22: #{tpu_custom_call.1} parent=11 // pred_check_branch
          %173 = sbr.rel (%p171) target = $region24
        $region23: #{tpu_custom_call.1} parent=11 // pred_region
          _
        $region24: #{tpu_custom_call.1} parent=11 // pred_fallthru
          _
        // Predicated region
        $region25: #{tpu_custom_call.1} parent=11 // pred_check
          %p174 = pneg %p124
        $region26: #{tpu_custom_call.1} parent=11 // pred_check_branch
          %176 = sbr.rel (%p174) target = $region28
        $region27: #{tpu_custom_call.1} parent=11 // pred_region
          _
        $region28: #{tpu_custom_call.1} parent=11 // pred_fallthru
          _
      $region12: #{tpu_custom_call.1} parent=5 // pred_fallthru
        _
      %p177 = scmp.lt.s32.totalorder %s14, 2
      // Predicated region
      $region29: #{tpu_custom_call.1} parent=5 // pred_check
        %p178 = pneg %p177
      $region30: #{tpu_custom_call.1} parent=5 // pred_check_branch
        %180 = sbr.rel (%p178) target = $region32
      $region31: #{tpu_custom_call.1} parent=5 // pred_region
        // Predicated region
        $region33: #{tpu_custom_call.1} parent=31 // pred_check
          %p181 = pneg %p34
        $region34: #{tpu_custom_call.1} parent=31 // pred_check_branch
          %183 = sbr.rel (%p181) target = $region36
        $region35: #{tpu_custom_call.1} parent=31 // pred_region
          %p184 = scmp.lt.s32.totalorder %s14, 1
          %s185 = scalar_select %p184, %s14, 1
          %s186 = smul.addr %s185, 8
          %s187 = scalar_lea.vmem %s0, %s186
        $region36: #{tpu_custom_call.1} parent=31 // pred_fallthru
          _
      $region32: #{tpu_custom_call.1} parent=5 // pred_fallthru
        _
      %p188 = scmp.le.s32.totalorder 1, %s14
      %p189 = scmp.lt.s32.totalorder %s14, 3
      %p190 = pnand %p188, %p189
      %p191 = pneg %p190
      // Predicated region
      $region37: #{tpu_custom_call.1} parent=5 // pred_check
        _
      $region38: #{tpu_custom_call.1} parent=5 // pred_check_branch
        %193 = sbr.rel (%p190) target = $region40
      $region39: #{tpu_custom_call.1} parent=5 // pred_region
        %s194 = ssub.s32 %s14, 1
        %p195 = scmp.lt.s32.totalorder %s19, 1
        %s196 = scalar_select %p195, %s19, 1
        %s197 = smul.addr %s196, 8
        %s198 = scalar_lea.vmem %s0, %s197
        %p199 = pneg %p40
        %p200 = pneg %p37
        %p201 = pneg %p61
        %p202 = pneg %p58
        %p203 = pneg %p82
        %p204 = pneg %p79
        %p205 = pneg %p103
        %p206 = pneg %p100
        %p207 = pneg %p124
        %p208 = pneg %p121
        %p209 = pneg %p150
        %p210 = pneg %p147
        %s211 = sand.u32 %s137, 1
        %s212 = scalar_lea.sflag [#allocation3], %s211
        %s213 = sand.u32 %s137, 1
        %s214 = smul.addr %s213, 8
        %s215 = scalar_lea.vmem [#allocation2], %s214
        %p216 = scmp.lt.s32.totalorder %s19, 1
        %s217 = scalar_select %p216, %s19, 1
        %s218 = smul.addr %s217, 8
        %s219 = scalar_lea.vmem %s0, %s218
        %v220 = vld [vmem:[%s219] sm:$0xff]
        %vm221 = vcmask 261120
        %v222 = vsel %vm221, %v220, 0.0
        %223 = vadd.xlane.f32.xlu0 %v222
        %v224 = vpop.xlane.xlu0 %223
        %v225 = vmul.f32 %v220, %v220
        %v226 = vsel %vm221, %v225, 0.0
        %227 = vadd.xlane.f32.xlu0 %v226
        %v228 = vpop.xlane.xlu0 %227
        %v229 = vmul.f32 %v224, 0.03125
        %v230 = vmul.f32 %v228, 0.03125
        %v231 = vmul.f32 %v229, %v229
        %v232 = vsub.f32 %v230, %v231
        %v233 = vadd.f32 %v232, 1e-05
        %v234 = vrsqrt.pop %v233
        %v235 = vld [vmem:[%s1] sm:$0x1]
        %v237 = vlaneseq
        %v238 = vshrl.u32 %v237, 7
        %v239 = vsub.s32 0, %v238
        %v240 = vrot.slane %v235, %v239
        %v242 = vmul.f32 %v234, %v240
        %v243 = vld [vmem:[%s2] sm:$0x1]
        %v244 = vmul.f32 %v229, %v242
        %v246 = vlaneseq
        %v247 = vshrl.u32 %v246, 7
        %v248 = vsub.s32 0, %v247
        %v249 = vrot.slane %v243, %v248
        %v251 = vsub.f32 %v249, %v244
        %v252 = vmul.f32 %v220, %v242
        %v253 = vadd.f32 %v252, %v251
        %v254 = vmax.f32 %v253, 0.0
        %v255 = vld [vmem:[%s3] sm:$0xff]
        %v256 = vld [vmem:[%s3 + $0x8] sm:$0xff]
        %v257 = vld [vmem:[%s3 + $0x10] sm:$0xff]
        %v258 = vld [vmem:[%s3 + $0x18] sm:$0xff]
        %v259 = vld [vmem:[%s3 + $0x20] sm:$0xff]
        %v260 = vld [vmem:[%s3 + $0x28] sm:$0xff]
        %v261 = vld [vmem:[%s3 + $0x30] sm:$0xff]
        %v262 = vld [vmem:[%s3 + $0x38] sm:$0xff]
        %v263 = vld [vmem:[%s3 + $0x40] sm:$0xff]
        %v264 = vld [vmem:[%s3 + $0x48] sm:$0xff]
        %v265 = vld [vmem:[%s3 + $0x50] sm:$0xff]
        %v266 = vld [vmem:[%s3 + $0x58] sm:$0xff]
        %v267 = vld [vmem:[%s3 + $0x60] sm:$0xff]
        %v268 = vld [vmem:[%s3 + $0x68] sm:$0xff]
        %v269 = vld [vmem:[%s3 + $0x70] sm:$0xff]
        %v270 = vld [vmem:[%s3 + $0x78] sm:$0xff]
        %v271 = vld [vmem:[%s4] sm:$0x1]
        %v273 = vlaneseq
        %v274 = vshrl.u32 %v273, 7
        %v275 = vsub.s32 0, %v274
        %v276 = vrot.slane %v271, %v275
        %v279 = vsel %vm221, %v254, 0
        %v282 = vsel %vm221, %v255, 0
        %v285 = vsel %vm221, %v256, 0
        %v288 = vsel %vm221, %v257, 0
        %v291 = vsel %vm221, %v258, 0
        %v294 = vsel %vm221, %v259, 0
        %v297 = vsel %vm221, %v260, 0
        %v300 = vsel %vm221, %v261, 0
        %v303 = vsel %vm221, %v262, 0
        %v306 = vsel %vm221, %v263, 0
        %v309 = vsel %vm221, %v264, 0
        %v312 = vsel %vm221, %v265, 0
        %v315 = vsel %vm221, %v266, 0
        %v318 = vsel %vm221, %v267, 0
        %v321 = vsel %vm221, %v268, 0
        %v324 = vsel %vm221, %v269, 0
        %v327 = vsel %vm221, %v270, 0
        %329 = vmatprep.subr.mxu0 0.0
        %330 = vmatpush1.xpose.msra.mxu0 %v282
        %331 = vmatprep.subr.mxu0 0.0
        %332 = vmatpush1.xpose.msra.mxu0 %v285
        %333 = vmatprep.subr.mxu0 0.0
        %334 = vmatpush1.xpose.msra.mxu0 %v288
        %335 = vmatprep.subr.mxu0 0.0
        %336 = vmatpush1.xpose.msra.mxu0 %v291
        %337 = vmatprep.subr.mxu0 0.0
        %338 = vmatpush1.xpose.msra.mxu0 %v294
        %339 = vmatprep.subr.mxu0 0.0
        %340 = vmatpush1.xpose.msra.mxu0 %v297
        %341 = vmatprep.subr.mxu0 0.0
        %342 = vmatpush1.xpose.msra.mxu0 %v300
        %343 = vmatprep.subr.mxu0 0.0
        %344 = vmatpush1.xpose.msra.mxu0 %v303
        %345 = vmatprep.subr.mxu0 0.0
        %346 = vmatpush1.xpose.msra.mxu0 %v306
        %347 = vmatprep.subr.mxu0 0.0
        %348 = vmatpush1.xpose.msra.mxu0 %v309
        %349 = vmatprep.subr.mxu0 0.0
        %350 = vmatpush1.xpose.msra.mxu0 %v312
        %351 = vmatprep.subr.mxu0 0.0
        %352 = vmatpush1.xpose.msra.mxu0 %v315
        %353 = vmatprep.subr.mxu0 0.0
        %354 = vmatpush1.xpose.msra.mxu0 %v318
        %355 = vmatprep.subr.mxu0 0.0
        %356 = vmatpush1.xpose.msra.mxu0 %v321
        %357 = vmatprep.subr.mxu0 0.0
        %358 = vmatpush1.xpose.msra.mxu0 %v324
        %359 = vmatprep.subr.mxu0 0.0
        %360 = vmatpush1.xpose.msra.mxu0 %v327
        %361 = vmatprep.subr.mxu0 0.0
        %362 = vmatpush1.xpose.msra.mxu0 0.0
        %363 = vmatprep.subr.mxu0 0.0
        %364 = vmatpush1.xpose.msra.mxu0 0.0
        %365 = vmatprep.subr.mxu0 0.0
        %366 = vmatpush1.xpose.msra.mxu0 0.0
        %367 = vmatprep.subr.mxu0 0.0
        %368 = vmatpush1.xpose.msra.mxu0 0.0
        %369 = vmatprep.subr.mxu0 0.0
        %370 = vmatpush1.xpose.msra.mxu0 0.0
        %371 = vmatprep.subr.mxu0 0.0
        %372 = vmatpush1.xpose.msra.mxu0 0.0
        %373 = vmatprep.subr.mxu0 0.0
        %374 = vmatpush1.xpose.msra.mxu0 0.0
        %375 = vmatprep.subr.mxu0 0.0
        %376 = vmatpush1.xpose.msra.mxu0 0.0
        %377 = vmatprep.subr.mxu0 0.0
        %378 = vmatpush1.xpose.msra.mxu0 0.0
        %379 = vmatprep.subr.mxu0 0.0
        %380 = vmatpush1.xpose.msra.mxu0 0.0
        %381 = vmatprep.subr.mxu0 0.0
        %382 = vmatpush1.xpose.msra.mxu0 0.0
        %383 = vmatprep.subr.mxu0 0.0
        %384 = vmatpush1.xpose.msra.mxu0 0.0
        %385 = vmatprep.subr.mxu0 0.0
        %386 = vmatpush1.xpose.msra.mxu0 0.0
        %387 = vmatprep.subr.mxu0 0.0
        %388 = vmatpush1.xpose.msra.mxu0 0.0
        %389 = vmatprep.subr.mxu0 0.0
        %390 = vmatpush1.xpose.msra.mxu0 0.0
        %391 = vmatprep.subr.mxu0 0.0
        %392 = vmatpush1.xpose.msra.mxu0 0.0
        %393 = vmatprep.mubr.f32.mxu0 0.0
        %394 = vmatmul.mubr.f32.gmra.mrb[0].mxu0 %v279
        %v395 = vpop.f32.mrb[0].mxu0
        %v396 = vadd.f32 %v276, %v395
        %v397 = vpop.f32.mrb[0].mxu0
        %398 = vdwg.mxu0
        %399 = vst [vmem:[%s215] sm:$0xff] %v396
        %s400 = sand.u32 %s137, 1
        %s401 = scalar_lea.sflag [#allocation3], %s400
        %s402 = sand.u32 %s137, 1
        %s403 = smul.addr %s402, 8
        %s404 = scalar_lea.vmem [#allocation2], %s403
        // Predicated region
        $region41: #{tpu_custom_call.1} parent=39 // pred_check
          %p405 = pneg %p147
        $region42: #{tpu_custom_call.1} parent=39 // pred_check_branch
          %407 = sbr.rel (%p405) target = $region44
        $region43: #{tpu_custom_call.1} parent=39 // pred_region
          %s409 = ssub.s32 128, 128
          %410 = vsyncadd %s401, %s409
          %s411 = smul.addr %s19, 128
          %s412 = scalar_lea.hbm %s5, %s411
          %s414 = sshll.u32 %s404, 4
          %s415 = int_to_ptr.vmem [resolvable:$true] %s414
          %417 = dma.vmem_to_hbm [thread:$0]  %s415, 128, %s412, %s401
        $region44: #{tpu_custom_call.1} parent=39 // pred_fallthru
          _
      $region40: #{tpu_custom_call.1} parent=5 // pred_fallthru
        _
      %p418 = scmp.le.s32.totalorder 2, %s14
      // Predicated region
      $region45: #{tpu_custom_call.1} parent=5 // pred_check
        %p419 = pneg %p418
      $region46: #{tpu_custom_call.1} parent=5 // pred_check_branch
        %421 = sbr.rel (%p419) target = $region48
      $region47: #{tpu_custom_call.1} parent=5 // pred_region
        %s422 = ssub.s32 %s14, 2
        // Predicated region
        $region49: #{tpu_custom_call.1} parent=47 // pred_check
          %p423 = pneg %p153
        $region50: #{tpu_custom_call.1} parent=47 // pred_check_branch
          %425 = sbr.rel (%p423) target = $region52
        $region51: #{tpu_custom_call.1} parent=47 // pred_region
          %s426 = sand.u32 %s138, 1
          %s427 = scalar_lea.sflag [#allocation3], %s426
          %s428 = sand.u32 %s138, 1
          %s429 = smul.addr %s428, 8
          %s430 = scalar_lea.vmem [#allocation2], %s429
          %431 = dma.done %s427, 128
        $region52: #{tpu_custom_call.1} parent=47 // pred_fallthru
          _
      $region48: #{tpu_custom_call.1} parent=5 // pred_fallthru
        _
    $region6: #{tpu_custom_call.1} parent=1 // loop_footer
      %s18 = sadd.s32 1, %s14
    $region7: #{tpu_custom_call.1} parent=1 // loop_footer_branch
      %13 = sbr.rel target = $region3
    $region8: #{tpu_custom_call.1} parent=1 // loop_exit
      _
    %432 = vsyncpa [#allocation3], 1
    %s433 = scalar_lea.sflag [#allocation3], 1
    %434 = vsyncpa %s433, 1

</llo_original>
